<compile_context>
chip_gen: v6e
topology: v6e:2x2x1
jax: 0.10.0
libtpu: 0.0.40
codegen_flags: <defaults>
</compile_context>

<pallas_src>
import jax
import jax.numpy as jnp
from jax.experimental import pallas as pl
from jax.experimental.pallas import tpu as pltpu


_LANE = 128      # lane width of a vreg
_SUBLANE = 8     # sublane depth of a vreg

# Conservative across v5e (16 MiB default scoped) / v6e (32 MiB) / v7x (32 MiB
# scoped, 64 MiB physical): budget the kernel footprint well under the limit we
# request explicitly below.
_VMEM_FOOTPRINT_BUDGET = 16 * 1024 * 1024
_VMEM_LIMIT_BYTES = 32 * 1024 * 1024


def _round_up(v, m):
    return ((v + m - 1) // m) * m


def _fused_head_kernel(x_ref, w_ref, b_ref, o_ref):
    # One MXU pass per batch tile: out = x @ W_fused + b_fused.
    # x/w are streamed as bf16; accumulate in f32, store f32.
    o_ref[...] = (
        jnp.dot(x_ref[...], w_ref[...], preferred_element_type=jnp.float32)
        + b_ref[...]
    ).astype(o_ref.dtype)


def fuse_pca_head_params(mean, std, components, pca_emb_dim, head_w, head_b):
    """Fold the fitted constants once (call at init, NOT per forward).

    reference: out = ((x - mean) / std) @ comp_K.T @ W.T + b
    fold:      P       = comp_K.T @ W.T        (D, C)
               W_fused = diag(1/std) @ P       (D, C)  -> bf16 (streamed weight)
               b_fused = b - (mean / std) @ P  (1, C)  -> f32
    """
    D = mean.shape[-1]
    K = int(pca_emb_dim)
    C = head_w.shape[0]
    proj = components[:K].T @ head_w.T                      # (D, C)
    w_fused = proj * (1.0 / std).reshape(D, 1)              # (D, C)
    b_fused = head_b.reshape(1, C) - (mean / std) @ proj    # (1, C)
    return w_fused.astype(jnp.bfloat16), b_fused.astype(jnp.float32)


def _choose_batch_tile(B, D, C):
    # Full VMEM footprint (bytes) for a tile of TB rows:
    #   2 * TB * D * 2   (bf16 x, double-buffered)
    # + 2 * TB * C * 4   (f32 out, double-buffered)
    # +     D  * C * 2   (bf16 fused weight, single-buffered)
    # +          C * 4   (f32 bias)
    fixed = D * C * 2 + C * 4
    per_row = 2 * D * 2 + 2 * C * 4
    rows_cap = max(_SUBLANE, (_VMEM_FOOTPRINT_BUDGET - fixed) // per_row)
    rows_cap = max(_SUBLANE, (rows_cap // _SUBLANE) * _SUBLANE)
    TB = min(_round_up(B, _SUBLANE), 1024, rows_cap)
    # v7x: guarantee >= 2 grid steps for B > 16 so the "parallel" batch axis
    # shards across both TensorCores (no effect on single-TC v5e/v6e).
    if B > 2 * _SUBLANE:
        TB = min(TB, _round_up(-(-B // 2), _SUBLANE))
    return max(TB, _SUBLANE)


def pca_reduced_head_forward(x, w_fused, b_fused):
    """x: (B, D) float32; w_fused: (D, C) bf16; b_fused: (1, C) f32 -> (B, C) f32."""
    B, D = x.shape
    C = w_fused.shape[1]
    TB = _choose_batch_tile(B, D, C)
    grid = (pl.cdiv(B, TB),)

    # Stream activations as bf16 (in a real pipeline the producer would emit
    # bf16 directly, avoiding even this cast pass).
    x_bf16 = x.astype(jnp.bfloat16)

    out = pl.pallas_call(
        _fused_head_kernel,
        out_shape=jax.ShapeDtypeStruct((B, C), jnp.float32),
        grid=grid,
        in_specs=[
            # x: tiled over batch (ragged last block handled by Pallas masking)
            pl.BlockSpec((TB, D), lambda i: (i, 0)),
            # fused weight / bias: grid-invariant -> single-buffered, VMEM-resident
            pl.BlockSpec((D, C), lambda i: (0, 0), pipeline_mode=pl.Buffered(1)),
            pl.BlockSpec((1, C), lambda i: (0, 0), pipeline_mode=pl.Buffered(1)),
        ],
        out_specs=pl.BlockSpec((TB, C), lambda i: (i, 0)),
        compiler_params=pltpu.CompilerParams(
            dimension_semantics=("parallel",),
            vmem_limit_bytes=_VMEM_LIMIT_BYTES,
        ),
    )(x_bf16, w_fused, b_fused)
    return out


if __name__ == "__main__":
    # Small, deterministic synthetic shapes consistent with the module:
    #   batch=8, emb_dim=32 (CLIP latent dim), pca_emb_dim=16, num_classes=4
    B, D, K, C = 8, 32, 16, 4

    key = jax.random.PRNGKey(0)
    k_x, k_mean, k_std, k_comp, k_w, k_b = jax.random.split(key, 6)

    x = jax.random.normal(k_x, (B, D), dtype=jnp.float32)
    mean = jax.random.normal(k_mean, (1, D), dtype=jnp.float32) * 0.1
    std = jax.random.uniform(k_std, (1, D), dtype=jnp.float32, minval=0.5, maxval=1.5)
    components = jax.random.normal(k_comp, (D, D), dtype=jnp.float32) / jnp.sqrt(D)
    head_w = jax.random.normal(k_w, (C, K), dtype=jnp.float32) / jnp.sqrt(K)
    head_b = jax.random.normal(k_b, (C,), dtype=jnp.float32) * 0.01

    # TODO(synk): fit_pca (sklearn PCA fit + dataset/CSV I/O) is training-time
    # host code with no kernel equivalent; only the fitted-constant forward is
    # implemented here.

    # Constant folding happens once at init, off the per-call path.
    w_fused, b_fused = fuse_pca_head_params(mean, std, components, K, head_w, head_b)
    w_fused, b_fused = jax.block_until_ready((w_fused, b_fused))

    out = pca_reduced_head_forward(x, w_fused, b_fused)
    out = jax.block_until_ready(out)

    # Pure-JAX f32 reference (same math / order as the PyTorch forward).
    x_norm = (x - mean) / std
    ref = x_norm @ components[:K].T @ head_w.T + head_b

    assert out.shape == (B, C)
    # bf16-streamed x / fused weight -> loosened tolerance vs the f32 reference.
    assert jnp.allclose(out, ref, atol=5e-2, rtol=5e-2), "mismatch vs reference"

    print("KERNEL_OK")
</pallas_src>

<mosaic_0001>
module attributes {stable_mosaic.version = 11 : i64} {
  func.func @_fused_head_kernel(%arg0: i32, %arg1: memref<8x32xbf16, #tpu.memory_space<vmem>>, %arg2: memref<32x4xbf16, #tpu.memory_space<vmem>>, %arg3: memref<1x4xf32, #tpu.memory_space<vmem>>, %arg4: memref<8x4xf32, #tpu.memory_space<vmem>>) attributes {dimension_semantics = [#tpu.dimension_semantics<parallel>], iteration_bounds = array<i64: 1>, scalar_prefetch = 0 : i64, scratch_operands = 0 : i64, tpu.core_type = #tpu.core_type<tc>, window_params = [{transform_indices = @transform_0, window_bounds = array<i64: 8, 32>}, {pipeline_mode = #tpu.pipeline_mode<synchronous>, transform_indices = @transform_1, window_bounds = array<i64: 32, 4>}, {pipeline_mode = #tpu.pipeline_mode<synchronous>, transform_indices = @transform_2, window_bounds = array<i64: 1, 4>}, {transform_indices = @transform_3, window_bounds = array<i64: 8, 4>}]} {
    %c0 = arith.constant 0 : index
    %c0_0 = arith.constant 0 : index
    %0 = vector.load %arg1[%c0, %c0_0] : memref<8x32xbf16, #tpu.memory_space<vmem>>, vector<8x32xbf16>
    %c0_1 = arith.constant 0 : index
    %c0_2 = arith.constant 0 : index
    %1 = vector.load %arg2[%c0_1, %c0_2] : memref<32x4xbf16, #tpu.memory_space<vmem>>, vector<32x4xbf16>
    %cst = arith.constant dense<0.000000e+00> : vector<8x4xf32>
    %2 = tpu.matmul %0, %1, %cst {dimension_numbers = #tpu.dot_dimension_numbers<[1], [0], [0], [1], [0, 0, 1, 1], [], []>} : vector<8x32xbf16>, vector<32x4xbf16>, vector<8x4xf32> -> vector<8x4xf32>
    %c0_3 = arith.constant 0 : index
    %c0_4 = arith.constant 0 : index
    %3 = vector.load %arg3[%c0_3, %c0_4] : memref<1x4xf32, #tpu.memory_space<vmem>>, vector<1x4xf32>
    %4 = vector.broadcast %3 : vector<1x4xf32> to vector<8x4xf32>
    %5 = arith.addf %2, %4 : vector<8x4xf32>
    %c0_5 = arith.constant 0 : index
    %c0_6 = arith.constant 0 : index
    %6 = vector.load %arg4[%c0_5, %c0_6] : memref<8x4xf32, #tpu.memory_space<vmem>>, vector<8x4xf32>
    tpu.vector_store %arg4[%c0_5, %c0_6], %5 {strides = array<i32>} : memref<8x4xf32, #tpu.memory_space<vmem>>, vector<8x4xf32>,
    return
  }
  func.func @transform_0(%arg0: i32) -> (i32, i32) {
    %c0_i32 = arith.constant 0 : i32
    %c0_i32_0 = arith.constant 0 : i32
    return %arg0, %c0_i32 : i32, i32
  }
  func.func @transform_1(%arg0: i32) -> (i32, i32) {
    %c0_i32 = arith.constant 0 : i32
    %c0_i32_0 = arith.constant 0 : i32
    %c0_i32_1 = arith.constant 0 : i32
    return %c0_i32, %c0_i32_0 : i32, i32
  }
  func.func @transform_2(%arg0: i32) -> (i32, i32) {
    %c0_i32 = arith.constant 0 : i32
    %c0_i32_0 = arith.constant 0 : i32
    %c0_i32_1 = arith.constant 0 : i32
    return %c0_i32, %c0_i32_0 : i32, i32
  }
  func.func @transform_3(%arg0: i32) -> (i32, i32) {
    %c0_i32 = arith.constant 0 : i32
    %c0_i32_0 = arith.constant 0 : i32
    return %arg0, %c0_i32 : i32, i32
  }
}

</mosaic_0001>

<llo_original>
// kernel: tpu_custom_call.1
$region0: #{tpu_custom_call.1}
  #allocation0 [shape = 'u32[]', space=smem, size = 0x4, offset = 0x4, fixed_abs, tag = 'smem constant byte address 0x4 - core index']
  #allocation1 [shape = 'u32[144,128]{1,0:T(1,128)}', space=vmem, size = 0x12000, scoped, tag = 'internal scratch']
  %s0 = inlined_call_operand.vmem [shape: bf16[8,32], index: 0, kind: input, shape index: {}]
  %s1 = inlined_call_operand.vmem [shape: bf16[32,4], index: 1, kind: input, shape index: {}]
  %s2 = inlined_call_operand.vmem [shape: f32[1,4], index: 2, kind: input, shape index: {}]
  %s3 = inlined_call_operand.vmem [shape: f32[8,4], index: 3, kind: output, shape index: {}]
  %s4 = sld [smem:[#allocation0]]
  $region22: #{tpu_custom_call.1} parent=0
    _
  %s6 = ssub.s32 1, %s4
  %s7 = scalar_select 0, %s6, %s4
  // Predicated region
  $region2: #{tpu_custom_call.1} parent=0 // pred_check
    _
  $region3: #{tpu_custom_call.1} parent=0 // pred_check_branch
    %9 = sbr.rel (0) target = $region5
  $region4: #{tpu_custom_call.1} parent=0 // pred_region
    _
  $region5: #{tpu_custom_call.1} parent=0 // pred_fallthru
    _
  // Predicated region
  $region6: #{tpu_custom_call.1} parent=0 // pred_check
    _
  $region7: #{tpu_custom_call.1} parent=0 // pred_check_branch
    %11 = sbr.rel (0) target = $region9
  $region8: #{tpu_custom_call.1} parent=0 // pred_region
    _
  $region9: #{tpu_custom_call.1} parent=0 // pred_fallthru
    _
  // Predicated region
  $region10: #{tpu_custom_call.1} parent=0 // pred_check
    _
  $region11: #{tpu_custom_call.1} parent=0 // pred_check_branch
    %13 = sbr.rel (0) target = $region13
  $region12: #{tpu_custom_call.1} parent=0 // pred_region
    _
  $region13: #{tpu_custom_call.1} parent=0 // pred_fallthru
    _
  %v15 = vld [vmem:[%s0] sm:$0xf]
  %v16 = vld [vmem:[%s1] sm:$0xf]
  %v17 = vld [vmem:[%s1 + $0x4] sm:$0xf]
  %v18 = vld [vmem:[%s1 + $0x8] sm:$0xf]
  %v19 = vld [vmem:[%s1 + $0xc] sm:$0xf]
  %v20 = vld [vmem:[%s2] sm:$0x1]
  %v22 = vlaneseq
  %v23 = vshrl.u32 %v22, 7
  %v24 = vsub.s32 0, %v23
  %v25 = vrot.slane %v20, %v24
  %v31 = vunpack.c.l.b16 %v16
  %v32 = vunpack.c.l.b16 %v17
  %v33 = vunpack.c.l.b16 %v18
  %v34 = vunpack.c.l.b16 %v19
  %v35 = vpack.c.b16 %v32, %v31
  %v36 = vpack.c.b16 %v34, %v33
  %vm39 = vcmask 261120
  %v41 = vsel %vm39, %v15, 0
  %43 = vmatprep.subr.bf16.mxu0 0
  %44 = vmatpush1.bf16.msra.mxu0 0
  %45 = vmatprep.subr.bf16.mxu0 0
  %46 = vmatpush1.bf16.msra.mxu0 0
  %47 = vmatprep.subr.bf16.mxu0 0
  %48 = vmatpush1.bf16.msra.mxu0 0
  %49 = vmatprep.subr.bf16.mxu0 0
  %50 = vmatpush1.bf16.msra.mxu0 0
  %51 = vmatprep.subr.bf16.mxu0 0
  %52 = vmatpush1.bf16.msra.mxu0 0
  %53 = vmatprep.subr.bf16.mxu0 0
  %54 = vmatpush1.bf16.msra.mxu0 0
  %55 = vmatprep.subr.bf16.mxu0 0
  %56 = vmatpush1.bf16.msra.mxu0 %v36
  %57 = vmatprep.subr.bf16.mxu0 0
  %58 = vmatpush1.bf16.msra.mxu0 %v35
  %59 = vmatprep.subr.bf16.mxu0 0
  %60 = vmatpush2.bf16.msra.mxu0 0
  %61 = vmatprep.subr.bf16.mxu0 0
  %62 = vmatpush2.bf16.msra.mxu0 0
  %63 = vmatprep.subr.bf16.mxu0 0
  %64 = vmatpush2.bf16.msra.mxu0 0
  %65 = vmatprep.subr.bf16.mxu0 0
  %66 = vmatpush2.bf16.msra.mxu0 0
  %67 = vmatprep.subr.bf16.mxu0 0
  %68 = vmatpush2.bf16.msra.mxu0 0
  %69 = vmatprep.subr.bf16.mxu0 0
  %70 = vmatpush2.bf16.msra.mxu0 0
  %71 = vmatprep.subr.bf16.mxu0 0
  %72 = vmatpush2.bf16.msra.mxu0 0
  %73 = vmatprep.subr.bf16.mxu0 0
  %74 = vmatpush2.bf16.msra.mxu0 0
  %75 = vmatprep.mubr.bf16.mxu0 0
  %76 = vmatmul.mubr.bf16.gmra.mxu0 %v41
  %v77 = vpop.f32.mrf.mxu0
  %v78 = vadd.f32 %v25, %v77
  %v79 = vpop.f32.mrf.mxu0
  %v80 = vpop.f32.mrf.mxu0
  %v81 = vpop.f32.mrf.mxu0
  %82 = vdwg.mxu0
  %vm83 = vcmask 31744
  %84 = vst.msk [vmem:[%s3] sm:$0xff] %vm83, %v78
  // Predicated region
  $region14: #{tpu_custom_call.1} parent=0 // pred_check
    _
  $region15: #{tpu_custom_call.1} parent=0 // pred_check_branch
    %86 = sbr.rel (0) target = $region17
  $region16: #{tpu_custom_call.1} parent=0 // pred_region
    _
  $region17: #{tpu_custom_call.1} parent=0 // pred_fallthru
    _
  // Predicated region
  $region18: #{tpu_custom_call.1} parent=0 // pred_check
    _
  $region19: #{tpu_custom_call.1} parent=0 // pred_check_branch
    %88 = sbr.rel (0) target = $region21
  $region20: #{tpu_custom_call.1} parent=0 // pred_region
    _
  $region21: #{tpu_custom_call.1} parent=0 // pred_fallthru
    _

</llo_original>
